<compile_context>
chip_gen: v7x
topology: tpu7x:2x2x1
jax: 0.10.0
libtpu: 0.0.40
codegen_flags: <defaults>
</compile_context>

<pallas_src>
import jax
import jax.numpy as jnp
from jax import lax
from jax.experimental import pallas as pl
from jax.experimental.pallas import tpu as pltpu


# --------------------------------------------------------------------------- #
# Kernel
# --------------------------------------------------------------------------- #
def _naive_kernel(xt_ref, xflat_ref, e_ref, o_ref):
    # xt_ref    : (bn, 3, bi)   x_t[n, d, i]       = x[n, i, d]   (lane-dense in i)
    # xflat_ref : (bn, 1, 3A)   x_flat[n, 0, a*3+d] = x[n, a, d]
    # e_ref     : (3, 3A)       one-hot expansion: e[d, a*3+d2] = (d == d2)
    # o_ref     : (bn, bi, 3A)  out[n, i, a*3+d]    = x[n, i, d] - x[n, a, d]
    e = e_ref[...].astype(jnp.float32)
    bn = o_ref.shape[0]
    for b in range(bn):  # static unroll; bn is small (<= 16)
        # left[i, a*3+d] = x[n, i, d] via one MXU matmul with transposed lhs
        # (contract the d axis of the (3, bi) tile against E's d axis).
        left = lax.dot_general(
            xt_ref[b].astype(jnp.float32), e,
            dimension_numbers=(((0,), (0,)), ((), ())),
            preferred_element_type=jnp.float32)              # (bi, 3A)
        right = xflat_ref[b].astype(jnp.float32)             # (1, 3A) -> sublane bcast
        o_ref[b] = (left - right).astype(o_ref.dtype)


# --------------------------------------------------------------------------- #
# Block-size selection (generation-aware, padded-lane VMEM accounting)
# --------------------------------------------------------------------------- #
def _round_up(v, m):
    return ((v + m - 1) // m) * m


_MAX_BN = 16  # bound for the static in-kernel unroll over batch rows


def _vmem_capacity_bytes():
    try:
        info = pltpu.get_tpu_info()
        cap = getattr(info, "vmem_capacity_bytes", None)
        if cap is not None:
            return int(cap)
    except Exception:
        pass
    return 64 << 20  # conservative default (v7x per-TensorCore VMEM)


def _choose_blocks(N, A, itemsize, target_bytes, vmem_limit, multi_core):
    """Pick (block_n, block_i).  block_i is either A or a multiple of 128."""
    lanes = _round_up(3 * A, 128)          # padded lane width of one output row
    row_bytes = lanes * itemsize           # VMEM bytes of one output row
    rows = max(1, target_bytes // row_bytes)
    if rows >= A:
        bi = A
        bn = int(max(1, min(N, rows // A, _MAX_BN)))
    else:
        bn = 1
        bi = min(A, max(128, (rows // 128) * 128))
        if bi >= A:
            bi = A

    # v7x megacore: make sure the parallel grid has >= 2, preferably balanced,
    # steps so both TensorCores get work (single-TC chips skip this).
    if multi_core:
        steps = pl.cdiv(N, bn) * pl.cdiv(A, bi)
        if steps < 2:
            if N >= 2 and N % 2 == 0:
                bn = N // 2                              # perfectly balanced
            elif bi == A and A >= 256:
                bi = _round_up(pl.cdiv(A, 2), 128)       # split the i axis
            elif N >= 2:
                bn = (N + 1) // 2                        # odd N: mild imbalance

    # Double-buffered VMEM budget with *padded* shapes (review item).
    def block_vmem(bn_, bi_):
        out_b = bn_ * _round_up(bi_, 8) * lanes * itemsize
        xt_b = bn_ * 8 * _round_up(bi_, 128) * itemsize
        flat_b = bn_ * 8 * lanes * itemsize
        e_b = 8 * lanes * itemsize
        return 2 * (out_b + xt_b + flat_b + e_b)

    while bn > 1 and block_vmem(bn, bi) > vmem_limit - (2 << 20):
        bn -= 1
    while bi != A and bi > 128 and block_vmem(bn, bi) > vmem_limit - (2 << 20):
        bi -= 128
    return bn, bi


# --------------------------------------------------------------------------- #
# Wrappers
# --------------------------------------------------------------------------- #
def _naive_pallas(x, block_n=None, block_i=None):
    N, A, D = x.shape
    itemsize = jnp.dtype(x.dtype).itemsize
    lanes = A * D

    vmem_cap = _vmem_capacity_bytes()
    if vmem_cap >= (100 << 20):
        # v5e / v6e: 128 MiB VMEM, single TensorCore -> bigger blocks, no split.
        target_bytes, vmem_limit, multi_core = 8 << 20, 64 << 20, False
    else:
        # v7x-like: 64 MiB VMEM per TC, 2 TCs -> smaller budget, balanced grid.
        target_bytes, vmem_limit, multi_core = 4 << 20, 32 << 20, True

    bn, bi = _choose_blocks(N, A, itemsize, target_bytes, vmem_limit, multi_core)
    if block_n is not None:
        bn = max(1, min(int(block_n), N, _MAX_BN))
    if block_i is not None:
        bi = int(block_i)
        if bi >= A:
            bi = A                               # full-dim block always legal
        else:
            bi = max(128, (bi // 128) * 128)     # lane constraint of the x_t tile

    # Inputs prepared in the wrapper (cost ~ 1/A of the output traffic):
    #   x_t[n, d, i]        = x[n, i, d]   lane-dense query tile (long DMA lines)
    #   x_flat[n, 0, a*3+d] = x[n, a, d]   free contiguous reshape
    #   expand[d, a*3+d2]   = (d == d2)    one-hot MXU expansion matrix
    x_t = jnp.swapaxes(x, 1, 2)                             # (N, 3, A)
    x_flat = x.reshape(N, 1, lanes)                         # (N, 1, 3A)
    expand = jnp.tile(jnp.eye(D, dtype=x.dtype), (1, A))    # (3, 3A)

    # Grid invariant: i is the innermost axis, so x_flat's block index (n,0,0)
    # is constant across consecutive steps and is NOT re-DMA'd.
    grid = (pl.cdiv(N, bn), pl.cdiv(A, bi))

    out_bytes = N * A * lanes * itemsize
    cost = pl.CostEstimate(
        flops=2 * N * A * D * lanes + N * A * lanes,
        transcendentals=0,
        bytes_accessed=2 * N * A * D * itemsize + D * lanes * itemsize + out_bytes,
    )

    return pl.pallas_call(
        _naive_kernel,
        out_shape=jax.ShapeDtypeStruct((N, A, lanes), x.dtype),
        grid=grid,
        in_specs=[
            pl.BlockSpec((bn, D, bi), lambda n, i: (n, 0, i)),
            pl.BlockSpec((bn, 1, lanes), lambda n, i: (n, 0, 0)),
            pl.BlockSpec((D, lanes), lambda n, i: (0, 0)),
        ],
        out_specs=pl.BlockSpec((bn, bi, lanes), lambda n, i: (n, i, 0)),
        compiler_params=pltpu.CompilerParams(
            dimension_semantics=("parallel", "parallel"),
            vmem_limit_bytes=vmem_limit),
        cost_estimate=cost,
    )(x_t, x_flat, expand)


def _naive_jax(x):
    N, A, D = x.shape
    diff = x[:, :, None, :] - x[:, None, :, :]     # (N, A, A, 3)
    return diff.reshape(N, A, A * D)


def naive_descriptor(x, *, use_pallas=None, block_n=None, block_i=None):
    """Equivalent of Naive.forward: (N, A, 3) -> (N, A, 3*A)."""
    N, A, D = x.shape
    assert D == 3, "Naive descriptor expects (N, A, 3) coordinates"
    out_bytes = N * A * A * D * jnp.dtype(x.dtype).itemsize
    if use_pallas is None:
        # Pure store-bandwidth op: below ~1 MiB of output the launch overhead
        # dominates, and with 3A < 128 every store is a masked partial store,
        # so let XLA's fused broadcast-subtract handle those regimes.
        use_pallas = (out_bytes >= (1 << 20)) and (3 * A >= 128)
    if not use_pallas:
        return _naive_jax(x)
    return _naive_pallas(x, block_n=block_n, block_i=block_i)


def _reference(x):
    # pure-JAX mirror of the PyTorch loop + cat(axis=2)
    N, A, D = x.shape
    pieces = [x - x[:, a, None] for a in range(A)]
    return jnp.concatenate(pieces, axis=2)


# --------------------------------------------------------------------------- #
# Self-test
# --------------------------------------------------------------------------- #
if __name__ == "__main__":
    k1, k2, k3 = jax.random.split(jax.random.PRNGKey(0), 3)

    # Config 1: small shape matching the module's intent (N x A x 3), forced Pallas.
    N, A = 2, 4
    x = jax.random.normal(k1, (N, A, 3), dtype=jnp.float32)
    out = jax.block_until_ready(naive_descriptor(x, use_pallas=True))
    ref = _reference(x)
    assert out.shape == (N, A, 3 * A), out.shape
    assert jnp.allclose(out, ref, atol=1e-6), "mismatch vs reference (config 1)"

    # Config 2: i-axis tiling with a ragged last block (grid = (3, 2)).
    x2 = jax.random.normal(k2, (3, 160, 3), dtype=jnp.float32)
    out2 = jax.block_until_ready(
        naive_descriptor(x2, use_pallas=True, block_n=1, block_i=128))
    assert jnp.allclose(out2, _reference(x2), atol=1e-6), "mismatch vs reference (config 2)"

    # Config 3: 3A >= 128 but not a multiple of 128 (masked tail lanes), auto blocks.
    x3 = jax.random.normal(k3, (2, 48, 3), dtype=jnp.float32)
    out3 = jax.block_until_ready(naive_descriptor(x3, use_pallas=True))
    assert jnp.allclose(out3, _reference(x3), atol=1e-6), "mismatch vs reference (config 3)"

    # Default dispatch (tiny problem -> XLA fallback) agrees too.
    assert jnp.allclose(naive_descriptor(x), ref, atol=1e-6), "mismatch vs reference (fallback)"

    print("KERNEL_OK")
</pallas_src>

<mosaic_0001>
module attributes {stable_mosaic.version = 11 : i64} {
  func.func @_naive_kernel(%arg0: i32, %arg1: i32, %arg2: memref<1x3x4xf32, #tpu.memory_space<vmem>>, %arg3: memref<1x1x12xf32, #tpu.memory_space<vmem>>, %arg4: memref<3x12xf32, #tpu.memory_space<vmem>>, %arg5: memref<1x4x12xf32, #tpu.memory_space<vmem>>) attributes {dimension_semantics = [#tpu.dimension_semantics<parallel>, #tpu.dimension_semantics<parallel>], iteration_bounds = array<i64: 2, 1>, scalar_prefetch = 0 : i64, scratch_operands = 0 : i64, tpu.core_type = #tpu.core_type<tc>, window_params = [{transform_indices = @transform_0, window_bounds = array<i64: 1, 3, 4>}, {transform_indices = @transform_1, window_bounds = array<i64: 1, 1, 12>}, {pipeline_mode = #tpu.pipeline_mode<synchronous>, transform_indices = @transform_2, window_bounds = array<i64: 3, 12>}, {transform_indices = @transform_3, window_bounds = array<i64: 1, 4, 12>}]} {
    %c0 = arith.constant 0 : index
    %c0_0 = arith.constant 0 : index
    %0 = vector.load %arg4[%c0, %c0_0] : memref<3x12xf32, #tpu.memory_space<vmem>>, vector<3x12xf32>
    %c0_1 = arith.constant 0 : index
    %c0_2 = arith.constant 0 : index
    %c0_3 = arith.constant 0 : index
    %1 = vector.load %arg2[%c0_1, %c0_2, %c0_3] : memref<1x3x4xf32, #tpu.memory_space<vmem>>, vector<1x3x4xf32>
    %2 = vector.shape_cast %1 : vector<1x3x4xf32> to vector<3x4xf32>
    %cst = arith.constant dense<0.000000e+00> : vector<4x12xf32>
    %3 = tpu.matmul %2, %0, %cst {dimension_numbers = #tpu.dot_dimension_numbers<[0], [0], [1], [1], [0, 1, 1, 1], [], []>} : vector<3x4xf32>, vector<3x12xf32>, vector<4x12xf32> -> vector<4x12xf32>
    %c0_4 = arith.constant 0 : index
    %c0_5 = arith.constant 0 : index
    %c0_6 = arith.constant 0 : index
    %4 = vector.load %arg3[%c0_4, %c0_5, %c0_6] : memref<1x1x12xf32, #tpu.memory_space<vmem>>, vector<1x1x12xf32>
    %5 = vector.shape_cast %4 : vector<1x1x12xf32> to vector<1x12xf32>
    %6 = vector.broadcast %5 : vector<1x12xf32> to vector<4x12xf32>
    %7 = arith.subf %3, %6 : vector<4x12xf32>
    %c0_7 = arith.constant 0 : index
    %c0_8 = arith.constant 0 : index
    %c0_9 = arith.constant 0 : index
    %8 = vector.load %arg5[%c0_7, %c0_8, %c0_9] : memref<1x4x12xf32, #tpu.memory_space<vmem>>, vector<1x4x12xf32>
    %9 = vector.shape_cast %8 : vector<1x4x12xf32> to vector<4x12xf32>
    %10 = vector.shape_cast %7 : vector<4x12xf32> to vector<1x4x12xf32>
    tpu.vector_store %arg5[%c0_7, %c0_8, %c0_9], %10 {strides = array<i32>} : memref<1x4x12xf32, #tpu.memory_space<vmem>>, vector<1x4x12xf32>,
    return
  }
  func.func @transform_0(%arg0: i32, %arg1: i32) -> (i32, i32, i32) {
    %c0_i32 = arith.constant 0 : i32
    %c0_i32_0 = arith.constant 0 : i32
    return %arg0, %c0_i32, %arg1 : i32, i32, i32
  }
  func.func @transform_1(%arg0: i32, %arg1: i32) -> (i32, i32, i32) {
    %c0_i32 = arith.constant 0 : i32
    %c0_i32_0 = arith.constant 0 : i32
    %c0_i32_1 = arith.constant 0 : i32
    return %arg0, %c0_i32, %c0_i32_0 : i32, i32, i32
  }
  func.func @transform_2(%arg0: i32, %arg1: i32) -> (i32, i32) {
    %c0_i32 = arith.constant 0 : i32
    %c0_i32_0 = arith.constant 0 : i32
    %c0_i32_1 = arith.constant 0 : i32
    return %c0_i32, %c0_i32_0 : i32, i32
  }
  func.func @transform_3(%arg0: i32, %arg1: i32) -> (i32, i32, i32) {
    %c0_i32 = arith.constant 0 : i32
    %c0_i32_0 = arith.constant 0 : i32
    return %arg0, %arg1, %c0_i32 : i32, i32, i32
  }
}

</mosaic_0001>

<llo_original>
// kernel: tpu_custom_call.1
$region0: #{tpu_custom_call.1}
  #allocation0 [shape = 'u32[]', space=smem, size = 0x4, offset = 0x4, fixed_abs, tag = 'smem constant byte address 0x4 - core index']
  #allocation1 [shape = 'u32[144,128]{1,0:T(1,128)}', space=vmem, size = 0x12000, scoped, tag = 'internal scratch']
  %s0 = inlined_call_operand.vmem [shape: f32[2,3,4], index: 0, kind: input, shape index: {}]
  %s1 = inlined_call_operand.vmem [shape: f32[2,1,12], index: 1, kind: input, shape index: {}]
  %s2 = inlined_call_operand.vmem [shape: f32[3,12], index: 2, kind: input, shape index: {}]
  %s3 = inlined_call_operand.hbm [shape: f32[2,4,12], index: 3, kind: output, shape index: {}]
  %s4 = sld [smem:[#allocation0]]
  $region45: #{tpu_custom_call.1} parent=0
    _
  %s6 = ssub.s32 1, %s4
  %s7 = scalar_select 0, %s6, %s4
  $region1: #{tpu_custom_call.1} parent=0
    #allocation2 [shape = 'u8[4096]{0}', space=vmem, size = 0x1000, scoped, tag = 'output window, operand 0']
    #allocation3 [shape = 's32[2]{0}', space=sflag, size = 0x8, scoped, tag = 'scoped memory for tpu_custom_call.1']
    %8 = vsyncpa [#allocation3], 0
    %s9 = scalar_lea.sflag [#allocation3], 1
    %10 = vsyncpa %s9, 0
    loop: start=0, step=1, limit=4
    $region2: #{tpu_custom_call.1} parent=1 // loop_pre_header
      _
    $region3: #{tpu_custom_call.1} parent=1 // loop_header
      %s12 = sphi 0, %s16
      %p13 = scmp.ge.s32.totalorder %s12, 4
      %s19 = sphi 0, %s31
      %s20 = sphi 0, %s27
      %s21 = sphi 0, %s19
      %s22 = sphi 0, %s20
      %s23 = sphi 0, %s21
      %s24 = sphi 0, %s22
      %s36 = sphi 0, %s38
      %s39 = sphi 0, %s36
      %s40 = sphi 0, %s39
      %s56 = sphi 0, %s40
      %s62 = sphi 0, %s64
      %s65 = sphi 0, %s62
      %s66 = sphi 0, %s65
      %s82 = sphi 0, %s66
      %s86 = sphi 0, %s86
      %s88 = sphi 0, %s86
      %s89 = sphi 0, %s88
      %s103 = sphi 0, %s89
      %s111 = sphi 0, %s113
      %s114 = sphi 0, %s111
      %s115 = sphi 0, %s114
      %s131 = sphi 0, %s115
    $region4: #{tpu_custom_call.1} parent=1 // loop_header_branch
      %15 = sbr.rel (%p13) target = $region8
    $region5: #{tpu_custom_call.1} parent=1 // loop_body
      %s17 = ssub.s32 %s12, 1
      %s18 = ssub.s32 %s12, 2
      %s25 = sadd.s32 1, %s20
      %p26 = scmp.ge.s32.totalorder %s25, 1
      %s27 = scalar_select %p26, 0, %s25
      %s28 = sadd.s32 1, %s19
      %s29 = scalar_select %p26, %s28, %s19
      %p30 = scmp.ge.s32.totalorder %s29, 2
      %s31 = scalar_select %p30, 0, %s29
      %s32 = ssub.s32 %s19, %s31
      %s33 = ssub.s32 %s20, %s27
      %s34 = sor.u32 %s32, %s33
      %p35 = scmp.eq.s32.totalorder %s34, 0
      %s37 = sadd.s32 %s36, 1
      %s38 = scalar_select %p35, %s36, %s37
      %p41 = pneg %p35
      %p42 = scmp.eq.s32.totalorder %s12, 1
      %p43 = por %p41, %p42
      %p44 = scmp.ne.s32.totalorder %s36, %s39
      %p45 = scmp.eq.s32.totalorder %s12, 0
      %p46 = por %p44, %p45
      %p47 = scmp.ne.s32.totalorder %s36, %s39
      %p48 = scmp.eq.s32.totalorder %s17, 1
      %p49 = por %p47, %p48
      %p50 = scmp.ne.s32.totalorder %s39, %s40
      %p51 = scmp.eq.s32.totalorder %s17, 0
      %p52 = por %p50, %p51
      %p53 = scmp.ne.s32.totalorder %s39, %s40
      %p54 = scmp.eq.s32.totalorder %s18, 1
      %p55 = por %p53, %p54
      %p57 = scmp.ne.s32.totalorder %s40, %s56
      %p58 = scmp.eq.s32.totalorder %s18, 0
      %p59 = por %p57, %p58
      %s60 = ssub.s32 %s19, %s31
      %p61 = scmp.eq.s32.totalorder %s60, 0
      %s63 = sadd.s32 %s62, 1
      %s64 = scalar_select %p61, %s62, %s63
      %p67 = pneg %p61
      %p68 = scmp.eq.s32.totalorder %s12, 1
      %p69 = por %p67, %p68
      %p70 = scmp.ne.s32.totalorder %s62, %s65
      %p71 = scmp.eq.s32.totalorder %s12, 0
      %p72 = por %p70, %p71
      %p73 = scmp.ne.s32.totalorder %s62, %s65
      %p74 = scmp.eq.s32.totalorder %s17, 1
      %p75 = por %p73, %p74
      %p76 = scmp.ne.s32.totalorder %s65, %s66
      %p77 = scmp.eq.s32.totalorder %s17, 0
      %p78 = por %p76, %p77
      %p79 = scmp.ne.s32.totalorder %s65, %s66
      %p80 = scmp.eq.s32.totalorder %s18, 1
      %p81 = por %p79, %p80
      %p83 = scmp.ne.s32.totalorder %s66, %s82
      %p84 = scmp.eq.s32.totalorder %s18, 0
      %p85 = por %p83, %p84
      %s87 = sadd.s32 %s86, 1
      %p90 = scmp.eq.s32.totalorder %s12, 1
      %p91 = scmp.ne.s32.totalorder %s86, %s88
      %p92 = scmp.eq.s32.totalorder %s12, 0
      %p93 = por %p91, %p92
      %p94 = scmp.ne.s32.totalorder %s86, %s88
      %p95 = scmp.eq.s32.totalorder %s17, 1
      %p96 = por %p94, %p95
      %p97 = scmp.ne.s32.totalorder %s88, %s89
      %p98 = scmp.eq.s32.totalorder %s17, 0
      %p99 = por %p97, %p98
      %p100 = scmp.ne.s32.totalorder %s88, %s89
      %p101 = scmp.eq.s32.totalorder %s18, 1
      %p102 = por %p100, %p101
      %p104 = scmp.ne.s32.totalorder %s89, %s103
      %p105 = scmp.eq.s32.totalorder %s18, 0
      %p106 = por %p104, %p105
      %s107 = ssub.s32 %s19, %s31
      %s108 = ssub.s32 %s20, %s27
      %s109 = sor.u32 %s107, %s108
      %p110 = scmp.eq.s32.totalorder %s109, 0
      %s112 = sadd.s32 %s111, 1
      %s113 = scalar_select %p110, %s111, %s112
      %p116 = pneg %p110
      %p117 = scmp.eq.s32.totalorder %s12, 1
      %p118 = por %p116, %p117
      %p119 = scmp.ne.s32.totalorder %s111, %s114
      %p120 = scmp.eq.s32.totalorder %s12, 0
      %p121 = por %p119, %p120
      %p122 = scmp.ne.s32.totalorder %s111, %s114
      %p123 = scmp.eq.s32.totalorder %s17, 1
      %p124 = por %p122, %p123
      %p125 = scmp.ne.s32.totalorder %s114, %s115
      %p126 = scmp.eq.s32.totalorder %s17, 0
      %p127 = por %p125, %p126
      %p128 = scmp.ne.s32.totalorder %s114, %s115
      %p129 = scmp.eq.s32.totalorder %s18, 1
      %p130 = por %p128, %p129
      %p132 = scmp.ne.s32.totalorder %s115, %s131
      %p133 = scmp.eq.s32.totalorder %s18, 0
      %p134 = por %p132, %p133
      %p135 = scmp.le.s32.totalorder 1, %s12
      %p136 = scmp.lt.s32.totalorder %s12, 3
      %p137 = pnand %p135, %p136
      %p138 = pneg %p137
      // Predicated region
      $region9: #{tpu_custom_call.1} parent=5 // pred_check
        _
      $region10: #{tpu_custom_call.1} parent=5 // pred_check_branch
        %140 = sbr.rel (%p137) target = $region12
      $region11: #{tpu_custom_call.1} parent=5 // pred_region
        %s141 = ssub.s32 %s12, 1
        // Predicated region
        $region13: #{tpu_custom_call.1} parent=11 // pred_check
          %p142 = pneg %p99
        $region14: #{tpu_custom_call.1} parent=11 // pred_check_branch
          %144 = sbr.rel (%p142) target = $region16
        $region15: #{tpu_custom_call.1} parent=11 // pred_region
          _
        $region16: #{tpu_custom_call.1} parent=11 // pred_fallthru
          _
      $region12: #{tpu_custom_call.1} parent=5 // pred_fallthru
        _
      %p145 = scmp.lt.s32.totalorder %s12, 2
      // Predicated region
      $region17: #{tpu_custom_call.1} parent=5 // pred_check
        %p146 = pneg %p145
      $region18: #{tpu_custom_call.1} parent=5 // pred_check_branch
        %148 = sbr.rel (%p146) target = $region20
      $region19: #{tpu_custom_call.1} parent=5 // pred_region
        // Predicated region
        $region21: #{tpu_custom_call.1} parent=19 // pred_check
          %p149 = pneg %p46
        $region22: #{tpu_custom_call.1} parent=19 // pred_check_branch
          %151 = sbr.rel (%p149) target = $region24
        $region23: #{tpu_custom_call.1} parent=19 // pred_region
          %p152 = scmp.lt.s32.totalorder %s19, 1
          %s153 = scalar_select %p152, %s19, 1
          %p154 = scmp.lt.s32.totalorder %s20, 0
          %s155 = scalar_select %p154, %s20, 0
          %s156 = sadd.s32 %s155, %s153
          %s157 = smul.addr %s156, 4
          %s158 = scalar_lea.vmem %s0, %s157
        $region24: #{tpu_custom_call.1} parent=19 // pred_fallthru
          _
        // Predicated region
        $region25: #{tpu_custom_call.1} parent=19 // pred_check
          %p159 = pneg %p72
        $region26: #{tpu_custom_call.1} parent=19 // pred_check_branch
          %161 = sbr.rel (%p159) target = $region28
        $region27: #{tpu_custom_call.1} parent=19 // pred_region
          %p162 = scmp.lt.s32.totalorder %s19, 1
          %s163 = scalar_select %p162, %s19, 1
          %s164 = scalar_lea.vmem %s1, %s163
        $region28: #{tpu_custom_call.1} parent=19 // pred_fallthru
          _
      $region20: #{tpu_custom_call.1} parent=5 // pred_fallthru
        _
      %p165 = scmp.le.s32.totalorder 1, %s12
      %p166 = scmp.lt.s32.totalorder %s12, 3
      %p167 = pnand %p165, %p166
      %p168 = pneg %p167
      // Predicated region
      $region29: #{tpu_custom_call.1} parent=5 // pred_check
        _
      $region30: #{tpu_custom_call.1} parent=5 // pred_check_branch
        %170 = sbr.rel (%p167) target = $region32
      $region31: #{tpu_custom_call.1} parent=5 // pred_region
        %s171 = ssub.s32 %s12, 1
        %p172 = scmp.lt.s32.totalorder %s21, 1
        %s173 = scalar_select %p172, %s21, 1
        %p174 = scmp.lt.s32.totalorder %s22, 0
        %s175 = scalar_select %p174, %s22, 0
        %s176 = sadd.s32 %s175, %s173
        %s177 = smul.addr %s176, 4
        %s178 = scalar_lea.vmem %s0, %s177
        %p179 = pneg %p52
        %p180 = pneg %p49
        %p181 = scmp.lt.s32.totalorder %s21, 1
        %s182 = scalar_select %p181, %s21, 1
        %s183 = scalar_lea.vmem %s1, %s182
        %p184 = pneg %p78
        %p185 = pneg %p75
        %p186 = pneg %p99
        %p187 = pneg %p96
        %p188 = pneg %p127
        %p189 = pneg %p124
        %s190 = sand.u32 %s114, 1
        %s191 = scalar_lea.sflag [#allocation3], %s190
        %s192 = sand.u32 %s114, 1
        %s193 = smul.addr %s192, 4
        %s194 = scalar_lea.vmem [#allocation2], %s193
        %p195 = scmp.lt.s32.totalorder %s21, 1
        %s196 = scalar_select %p195, %s21, 1
        %p197 = scmp.lt.s32.totalorder %s22, 0
        %s198 = scalar_select %p197, %s22, 0
        %s199 = sadd.s32 %s198, %s196
        %s200 = smul.addr %s199, 4
        %s201 = scalar_lea.vmem %s0, %s200
        %p202 = scmp.lt.s32.totalorder %s21, 1
        %s203 = scalar_select %p202, %s21, 1
        %s204 = scalar_lea.vmem %s1, %s203
        %v205 = vld [vmem:[%s2] sm:$0x7]
        %v206 = vld [vmem:[%s201] sm:$0x7]
        %207 = vxpose.xlu0.b32.start [1/16] %v206, 128
        %208 = vxpose.xlu0.b32.cont [2/16] 0.0, 128
        %209 = vxpose.xlu0.b32.cont [3/16] 0.0, 128
        %210 = vxpose.xlu0.b32.cont [4/16] 0.0, 128
        %211 = vxpose.xlu0.b32.cont [5/16] 0.0, 128
        %212 = vxpose.xlu0.b32.cont [6/16] 0.0, 128
        %213 = vxpose.xlu0.b32.cont [7/16] 0.0, 128
        %214 = vxpose.xlu0.b32.cont [8/16] 0.0, 128
        %215 = vxpose.xlu0.b32.cont [9/16] 0.0, 128
        %216 = vxpose.xlu0.b32.cont [10/16] 0.0, 128
        %217 = vxpose.xlu0.b32.cont [11/16] 0.0, 128
        %218 = vxpose.xlu0.b32.cont [12/16] 0.0, 128
        %219 = vxpose.xlu0.b32.cont [13/16] 0.0, 128
        %220 = vxpose.xlu0.b32.cont [14/16] 0.0, 128
        %221 = vxpose.xlu0.b32.cont [15/16] 0.0, 128
        %222 = vxpose.xlu0.b32.end [16/16] 0.0, 128
        %v223 = vpop.trf.xlu0
        %v224 = vpop.trf.xlu0
        %v225 = vpop.trf.xlu0
        %v226 = vpop.trf.xlu0
        %v227 = vpop.trf.xlu0
        %v228 = vpop.trf.xlu0
        %v229 = vpop.trf.xlu0
        %v230 = vpop.trf.xlu0
        %v231 = vpop.trf.xlu0
        %v232 = vpop.trf.xlu0
        %v233 = vpop.trf.xlu0
        %v234 = vpop.trf.xlu0
        %v235 = vpop.trf.xlu0
        %v236 = vpop.trf.xlu0
        %v237 = vpop.trf.xlu0
        %v238 = vpop.trf.xlu0
        %vm239 = vcmask 23552
        %v241 = vsel %vm239, %v223, 0
        %vm243 = vcmask 1042432
        %v245 = vsel %vm243, %v205, 0
        %247 = vmatprep.subr.mxu0 0.0
        %248 = vmatpush1.msra.mxu0 %v245
        %249 = vmatprep.subr.mxu0 0.0
        %250 = vmatpush1.msra.mxu0 0.0
        %251 = vmatprep.subr.mxu0 0.0
        %252 = vmatpush1.msra.mxu0 0.0
        %253 = vmatprep.subr.mxu0 0.0
        %254 = vmatpush1.msra.mxu0 0.0
        %255 = vmatprep.subr.mxu0 0.0
        %256 = vmatpush1.msra.mxu0 0.0
        %257 = vmatprep.subr.mxu0 0.0
        %258 = vmatpush1.msra.mxu0 0.0
        %259 = vmatprep.subr.mxu0 0.0
        %260 = vmatpush1.msra.mxu0 0.0
        %261 = vmatprep.subr.mxu0 0.0
        %262 = vmatpush1.msra.mxu0 0.0
        %263 = vmatprep.subr.mxu0 0.0
        %264 = vmatpush1.msra.mxu0 0.0
        %265 = vmatprep.subr.mxu0 0.0
        %266 = vmatpush1.msra.mxu0 0.0
        %267 = vmatprep.subr.mxu0 0.0
        %268 = vmatpush1.msra.mxu0 0.0
        %269 = vmatprep.subr.mxu0 0.0
        %270 = vmatpush1.msra.mxu0 0.0
        %271 = vmatprep.subr.mxu0 0.0
        %272 = vmatpush1.msra.mxu0 0.0
        %273 = vmatprep.subr.mxu0 0.0
        %274 = vmatpush1.msra.mxu0 0.0
        %275 = vmatprep.subr.mxu0 0.0
        %276 = vmatpush1.msra.mxu0 0.0
        %277 = vmatprep.subr.mxu0 0.0
        %278 = vmatpush1.msra.mxu0 0.0
        %279 = vmatprep.subr.mxu0 0.0
        %280 = vmatpush1.msra.mxu0 0.0
        %281 = vmatprep.subr.mxu0 0.0
        %282 = vmatpush1.msra.mxu0 0.0
        %283 = vmatprep.subr.mxu0 0.0
        %284 = vmatpush1.msra.mxu0 0.0
        %285 = vmatprep.subr.mxu0 0.0
        %286 = vmatpush1.msra.mxu0 0.0
        %287 = vmatprep.subr.mxu0 0.0
        %288 = vmatpush1.msra.mxu0 0.0
        %289 = vmatprep.subr.mxu0 0.0
        %290 = vmatpush1.msra.mxu0 0.0
        %291 = vmatprep.subr.mxu0 0.0
        %292 = vmatpush1.msra.mxu0 0.0
        %293 = vmatprep.subr.mxu0 0.0
        %294 = vmatpush1.msra.mxu0 0.0
        %295 = vmatprep.subr.mxu0 0.0
        %296 = vmatpush1.msra.mxu0 0.0
        %297 = vmatprep.subr.mxu0 0.0
        %298 = vmatpush1.msra.mxu0 0.0
        %299 = vmatprep.subr.mxu0 0.0
        %300 = vmatpush1.msra.mxu0 0.0
        %301 = vmatprep.subr.mxu0 0.0
        %302 = vmatpush1.msra.mxu0 0.0
        %303 = vmatprep.subr.mxu0 0.0
        %304 = vmatpush1.msra.mxu0 0.0
        %305 = vmatprep.subr.mxu0 0.0
        %306 = vmatpush1.msra.mxu0 0.0
        %307 = vmatprep.subr.mxu0 0.0
        %308 = vmatpush1.msra.mxu0 0.0
        %309 = vmatprep.subr.mxu0 0.0
        %310 = vmatpush1.msra.mxu0 0.0
        %311 = vmatprep.mubr.f32.mxu0 0.0
        %312 = vmatmul.mubr.f32.gmra.mrb[0].mxu0 %v241
        %v313 = vpop.f32.mrb[0].mxu0
        %v314 = vadd.f32 0.0, %v313
        %v315 = vpop.f32.mrb[0].mxu0
        %316 = vdwg.mxu0
        %v317 = vld [vmem:[%s204] sm:$0x1]
        %v319 = vlaneseq
        %v320 = vshrl.u32 %v319, 7
        %v321 = vsub.s32 0, %v320
        %v322 = vrot.slane %v317, %v321
        %v324 = vsub.f32 %v314, %v322
        %vm325 = vcmask 93184
        %326 = vst.msk [vmem:[%s194] sm:$0xf] %vm325, %v324
        %s327 = sand.u32 %s114, 1
        %s328 = scalar_lea.sflag [#allocation3], %s327
        %s329 = sand.u32 %s114, 1
        %s330 = smul.addr %s329, 4
        %s331 = scalar_lea.vmem [#allocation2], %s330
        // Predicated region
        $region33: #{tpu_custom_call.1} parent=31 // pred_check
          %p332 = pneg %p124
        $region34: #{tpu_custom_call.1} parent=31 // pred_check_branch
          %334 = sbr.rel (%p332) target = $region36
        $region35: #{tpu_custom_call.1} parent=31 // pred_region
          %s336 = ssub.s32 64, 64
          %337 = vsyncadd %s328, %s336
          %s338 = sadd.s32 %s22, %s21
          %s339 = smul.addr %s338, 64
          %s340 = scalar_lea.hbm %s3, %s339
          %s342 = sshll.u32 %s331, 4
          %s343 = int_to_ptr.vmem [resolvable:$true] %s342
          %345 = dma.vmem_to_hbm [thread:$0]  %s343, 64, %s340, %s328
        $region36: #{tpu_custom_call.1} parent=31 // pred_fallthru
          _
      $region32: #{tpu_custom_call.1} parent=5 // pred_fallthru
        _
      %p346 = scmp.le.s32.totalorder 2, %s12
      // Predicated region
      $region37: #{tpu_custom_call.1} parent=5 // pred_check
        %p347 = pneg %p346
      $region38: #{tpu_custom_call.1} parent=5 // pred_check_branch
        %349 = sbr.rel (%p347) target = $region40
      $region39: #{tpu_custom_call.1} parent=5 // pred_region
        %s350 = ssub.s32 %s12, 2
        // Predicated region
        $region41: #{tpu_custom_call.1} parent=39 // pred_check
          %p351 = pneg %p130
        $region42: #{tpu_custom_call.1} parent=39 // pred_check_branch
          %353 = sbr.rel (%p351) target = $region44
        $region43: #{tpu_custom_call.1} parent=39 // pred_region
          %s354 = sand.u32 %s115, 1
          %s355 = scalar_lea.sflag [#allocation3], %s354
          %s356 = sand.u32 %s115, 1
          %s357 = smul.addr %s356, 4
          %s358 = scalar_lea.vmem [#allocation2], %s357
          %359 = dma.done %s355, 64
        $region44: #{tpu_custom_call.1} parent=39 // pred_fallthru
          _
      $region40: #{tpu_custom_call.1} parent=5 // pred_fallthru
        _
    $region6: #{tpu_custom_call.1} parent=1 // loop_footer
      %s16 = sadd.s32 1, %s12
    $region7: #{tpu_custom_call.1} parent=1 // loop_footer_branch
      %11 = sbr.rel target = $region3
    $region8: #{tpu_custom_call.1} parent=1 // loop_exit
      _
    %360 = vsyncpa [#allocation3], 1
    %s361 = scalar_lea.sflag [#allocation3], 1
    %362 = vsyncpa %s361, 1

</llo_original>
